<compile_context>
chip_gen: v6e
topology: v6e:2x2x1
jax: 0.10.0
libtpu: 0.0.40
codegen_flags: <defaults>
</compile_context>

<pallas_src>
import functools

import jax
import jax.numpy as jnp
from jax.experimental import pallas as pl
from jax.experimental.pallas import tpu as pltpu


_SUBLANE_PACK = 16  # batch-tile granularity: keeps f32 *and* bf16 blocks tile-aligned


def _positions_mlp_kernel(w1_ref, b1_ref, w2_ref, b2_ref,
                          pos_ref, mask_ref, out_ref,
                          *, eps, hidden_dim, inv_n):
    # pos_ref:  (3, TB, N) VMEM  -- D-major; each coordinate is a dense (TB, N) plane
    # mask_ref: (TB, N)    VMEM  (bf16)
    # out_ref:  (3, TB, N) VMEM
    # w1/b1/w2: (H,) SMEM, b2: (1,) SMEM
    p0 = pos_ref[0].astype(jnp.float32)            # (TB, N)
    p1 = pos_ref[1].astype(jnp.float32)
    p2 = pos_ref[2].astype(jnp.float32)
    mask = mask_ref[...].astype(jnp.float32)       # (TB, N)

    # ||pos|| per node: explicit 3-term unroll (2 VPU adds), no wide reduce.
    norm = jnp.sqrt(p0 * p0 + p1 * p1 + p2 * p2)   # (TB, N)

    # MLP(1 -> H -> 1): H scalar-weighted FMAs + ReLU on full (TB, N) vregs,
    # scalar weights read from SMEM (static unroll).
    new_norm = jnp.zeros_like(norm) + b2_ref[0]
    for j in range(hidden_dim):
        h = jnp.maximum(w1_ref[j] * norm + b1_ref[j], 0.0)
        new_norm = new_norm + w2_ref[j] * h        # (TB, N)

    # One per-node scale; the reciprocal goes to the EUP (approx) and one Newton
    # step restores full f32 accuracy.  Node mask folded in.
    d = norm + eps
    r = pl.reciprocal(d, approx=True)
    r = r * (2.0 - d * r)
    scale = new_norm * r * mask                    # (TB, N)

    q0 = p0 * scale
    q1 = p1 * scale
    q2 = p2 * scale

    # Centre: subtract the per-(graph, coord) mean over all N nodes
    # (torch.mean(dim=1); masked nodes contribute zeros).
    out_ref[0] = (q0 - jnp.sum(q0, axis=1, keepdims=True) * inv_n).astype(out_ref.dtype)
    out_ref[1] = (q1 - jnp.sum(q1, axis=1, keepdims=True) * inv_n).astype(out_ref.dtype)
    out_ref[2] = (q2 - jnp.sum(q2, axis=1, keepdims=True) * inv_n).astype(out_ref.dtype)


def _choose_tiling(B, N, itemsize, target_pos_bytes=6 << 20):
    """Pick a batch tile TB (multiple of 16) with ~target_pos_bytes of pos per
    tile, and the padded batch size.  N is never tiled (mean over N)."""
    cap = (target_pos_bytes // (3 * N * itemsize)) // _SUBLANE_PACK * _SUBLANE_PACK
    cap = max(_SUBLANE_PACK, cap)
    b_round = ((B + _SUBLANE_PACK - 1) // _SUBLANE_PACK) * _SUBLANE_PACK
    tb = min(b_round, cap)
    b_pad = ((B + tb - 1) // tb) * tb
    return tb, b_pad


def positions_mlp_dense(pos_dbn, node_mask, params, *, eps=1e-5, block_b=None):
    """D-major entry point (preferred: no relayout passes).

    pos_dbn:   (3, B, N)  -- coordinates major, nodes on the lane axis
    node_mask: (B, N)
    params = (w1 (H,1), b1 (H,), w2 (1,H), b2 (1,)) as in nn.Linear.
    Returns (3, B, N) in pos_dbn.dtype.
    """
    w1, b1, w2, b2 = params
    D, B, N = pos_dbn.shape
    assert D == 3, "PositionsMLP expects 3-D coordinates"
    H = int(b1.shape[-1])
    itemsize = jnp.dtype(pos_dbn.dtype).itemsize

    if block_b is None:
        tb, b_pad = _choose_tiling(B, N, itemsize)
    else:
        tb = int(block_b)
        b_pad = ((B + tb - 1) // tb) * tb

    mask = node_mask.astype(jnp.bfloat16)          # 2 bytes/node HBM read
    if b_pad != B:
        # Zero padding: padded graphs produce zeros and are sliced off below.
        pos_dbn = jnp.pad(pos_dbn, ((0, 0), (0, b_pad - B), (0, 0)))
        mask = jnp.pad(mask, ((0, b_pad - B), (0, 0)))

    kernel = functools.partial(
        _positions_mlp_kernel, eps=float(eps), hidden_dim=H, inv_n=1.0 / N)
    smem_spec = pl.BlockSpec(memory_space=pltpu.MemorySpace.SMEM)

    # Explicit VMEM budget: 2 pipeline buffers x (pos_in + out + mask) + slack.
    tile_bytes = 2 * (2 * 3 * tb * N * itemsize + tb * N * 2)
    vmem_limit = max(tile_bytes + (4 << 20), 32 << 20)

    out = pl.pallas_call(
        kernel,
        out_shape=jax.ShapeDtypeStruct((3, b_pad, N), pos_dbn.dtype),
        grid_spec=pltpu.PrefetchScalarGridSpec(
            num_scalar_prefetch=0,
            grid=(b_pad // tb,),
            # NOTE: do NOT tile N -- the mean over nodes needs the full row.
            in_specs=[
                smem_spec,  # w1 (H,)
                smem_spec,  # b1 (H,)
                smem_spec,  # w2 (H,)
                smem_spec,  # b2 (1,)
                pl.BlockSpec((3, tb, N), lambda i: (0, i, 0)),
                pl.BlockSpec((tb, N), lambda i: (i, 0)),
            ],
            out_specs=pl.BlockSpec((3, tb, N), lambda i: (0, i, 0)),
        ),
        compiler_params=pltpu.CompilerParams(
            dimension_semantics=("parallel",),
            vmem_limit_bytes=int(vmem_limit),
        ),
    )(
        jnp.ravel(w1).astype(jnp.float32),
        jnp.ravel(b1).astype(jnp.float32),
        jnp.ravel(w2).astype(jnp.float32),
        jnp.ravel(b2).astype(jnp.float32),
        pos_dbn, mask,
    )
    return out[:, :B, :] if b_pad != B else out


def positions_mlp(pos, node_mask, params, eps=1e-5, block_b=None):
    """PyTorch-convention wrapper.  pos: (B, N, 3), node_mask: (B, N).

    NOTE: the two transposes below each cost an extra HBM pass; keep positions
    D-major in the surrounding model and call positions_mlp_dense to avoid them.
    """
    pos_dbn = jnp.transpose(pos, (2, 0, 1))                 # (3, B, N)
    out_dbn = positions_mlp_dense(pos_dbn, node_mask, params, eps=eps,
                                  block_b=block_b)
    return jnp.transpose(out_dbn, (1, 2, 0))                # (B, N, 3)


def positions_mlp_ref(pos, node_mask, params, eps=1e-5):
    """Pure-JAX reference matching the PyTorch module."""
    w1, b1, w2, b2 = params
    norm = jnp.linalg.norm(pos, axis=-1, keepdims=True)           # (B, N, 1)
    h = jax.nn.relu(norm @ w1.T + b1)                             # (B, N, H)
    new_norm = h @ w2.T + b2                                      # (B, N, 1)
    new_pos = pos * new_norm / (norm + eps)
    new_pos = new_pos * node_mask[..., None]
    new_pos = new_pos - jnp.mean(new_pos, axis=1, keepdims=True)
    return new_pos


if __name__ == "__main__":
    base_key = jax.random.PRNGKey(0)

    def run_case(case_idx, B, N, H):
        key = jax.random.fold_in(base_key, case_idx)
        k_pos, k_mask, k_w1, k_b1, k_w2, k_b2 = jax.random.split(key, 6)

        pos = jax.random.normal(k_pos, (B, N, 3), dtype=jnp.float32)
        node_mask = (jax.random.uniform(k_mask, (B, N)) > 0.3).astype(jnp.float32)
        node_mask = node_mask.at[:, 0].set(1.0)   # at least one active node per graph

        # Parameter shapes follow nn.Linear(1, H) and nn.Linear(H, 1).
        w1 = jax.random.normal(k_w1, (H, 1), dtype=jnp.float32) * 0.5
        b1 = jax.random.normal(k_b1, (H,), dtype=jnp.float32) * 0.1
        w2 = jax.random.normal(k_w2, (1, H), dtype=jnp.float32) * 0.5
        b2 = jax.random.normal(k_b2, (1,), dtype=jnp.float32) * 0.1
        params = (w1, b1, w2, b2)

        out = positions_mlp(pos, node_mask, params, eps=1e-5)
        jax.block_until_ready(out)

        ref = positions_mlp_ref(pos, node_mask, params, eps=1e-5)
        max_err = float(jnp.max(jnp.abs(out - ref)))
        assert jnp.allclose(out, ref, atol=1e-4, rtol=1e-4), max_err

    run_case(0, B=4, N=128, H=32)   # aligned shapes
    run_case(1, B=5, N=200, H=16)   # awkward B / non-128 N exercises padding path

    print("KERNEL_OK")
</pallas_src>

<mosaic_0001>
module attributes {stable_mosaic.version = 11 : i64} {
  func.func @_positions_mlp_kernel(%arg0: i32, %arg1: memref<32xf32, #tpu.memory_space<smem>>, %arg2: memref<32xf32, #tpu.memory_space<smem>>, %arg3: memref<32xf32, #tpu.memory_space<smem>>, %arg4: memref<1xf32, #tpu.memory_space<smem>>, %arg5: memref<3x16x128xf32, #tpu.memory_space<vmem>>, %arg6: memref<16x128xbf16, #tpu.memory_space<vmem>>, %arg7: memref<3x16x128xf32, #tpu.memory_space<vmem>>) attributes {dimension_semantics = [#tpu.dimension_semantics<parallel>], iteration_bounds = array<i64: 1>, scalar_prefetch = 0 : i64, scratch_operands = 0 : i64, tpu.core_type = #tpu.core_type<tc>, window_params = [{transform_indices = @transform_0, window_bounds = array<i64: 32>}, {transform_indices = @transform_1, window_bounds = array<i64: 32>}, {transform_indices = @transform_2, window_bounds = array<i64: 32>}, {transform_indices = @transform_3, window_bounds = array<i64: 1>}, {transform_indices = @transform_4, window_bounds = array<i64: 3, 16, 128>}, {transform_indices = @transform_5, window_bounds = array<i64: 16, 128>}, {transform_indices = @transform_6, window_bounds = array<i64: 3, 16, 128>}]} {
    %c0 = arith.constant 0 : index
    %c0_0 = arith.constant 0 : index
    %c0_1 = arith.constant 0 : index
    %0 = vector.load %arg5[%c0, %c0_0, %c0_1] : memref<3x16x128xf32, #tpu.memory_space<vmem>>, vector<1x16x128xf32>
    %1 = vector.shape_cast %0 : vector<1x16x128xf32> to vector<16x128xf32>
    %c1 = arith.constant 1 : index
    %c0_2 = arith.constant 0 : index
    %c0_3 = arith.constant 0 : index
    %2 = vector.load %arg5[%c1, %c0_2, %c0_3] : memref<3x16x128xf32, #tpu.memory_space<vmem>>, vector<1x16x128xf32>
    %3 = vector.shape_cast %2 : vector<1x16x128xf32> to vector<16x128xf32>
    %c2 = arith.constant 2 : index
    %c0_4 = arith.constant 0 : index
    %c0_5 = arith.constant 0 : index
    %4 = vector.load %arg5[%c2, %c0_4, %c0_5] : memref<3x16x128xf32, #tpu.memory_space<vmem>>, vector<1x16x128xf32>
    %5 = vector.shape_cast %4 : vector<1x16x128xf32> to vector<16x128xf32>
    %c0_6 = arith.constant 0 : index
    %c0_7 = arith.constant 0 : index
    %6 = vector.load %arg6[%c0_6, %c0_7] : memref<16x128xbf16, #tpu.memory_space<vmem>>, vector<16x128xbf16>
    %7 = arith.extf %6 : vector<16x128xbf16> to vector<16x128xf32>
    %8 = arith.mulf %1, %1 : vector<16x128xf32>
    %9 = arith.mulf %3, %3 : vector<16x128xf32>
    %10 = arith.addf %8, %9 : vector<16x128xf32>
    %11 = arith.mulf %5, %5 : vector<16x128xf32>
    %12 = arith.addf %10, %11 : vector<16x128xf32>
    %13 = math.sqrt %12 : vector<16x128xf32>
    %cst = arith.constant 0.000000e+00 : f32
    %14 = vector.broadcast %cst : f32 to vector<16x128xf32>
    %c0_8 = arith.constant 0 : index
    %15 = memref.load %arg4[%c0_8] : memref<1xf32, #tpu.memory_space<smem>>
    %16 = vector.broadcast %15 : f32 to vector<16x128xf32>
    %17 = arith.addf %14, %16 : vector<16x128xf32>
    %c0_9 = arith.constant 0 : index
    %18 = memref.load %arg1[%c0_9] : memref<32xf32, #tpu.memory_space<smem>>
    %19 = vector.broadcast %18 : f32 to vector<16x128xf32>
    %20 = arith.mulf %19, %13 : vector<16x128xf32>
    %c0_10 = arith.constant 0 : index
    %21 = memref.load %arg2[%c0_10] : memref<32xf32, #tpu.memory_space<smem>>
    %22 = vector.broadcast %21 : f32 to vector<16x128xf32>
    %23 = arith.addf %20, %22 : vector<16x128xf32>
    %cst_11 = arith.constant 0.000000e+00 : f32
    %24 = vector.broadcast %cst_11 : f32 to vector<16x128xf32>
    %25 = arith.maximumf %23, %24 : vector<16x128xf32>
    %c0_12 = arith.constant 0 : index
    %26 = memref.load %arg3[%c0_12] : memref<32xf32, #tpu.memory_space<smem>>
    %27 = vector.broadcast %26 : f32 to vector<16x128xf32>
    %28 = arith.mulf %27, %25 : vector<16x128xf32>
    %29 = arith.addf %17, %28 : vector<16x128xf32>
    %c1_13 = arith.constant 1 : index
    %30 = memref.load %arg1[%c1_13] : memref<32xf32, #tpu.memory_space<smem>>
    %31 = vector.broadcast %30 : f32 to vector<16x128xf32>
    %32 = arith.mulf %31, %13 : vector<16x128xf32>
    %c1_14 = arith.constant 1 : index
    %33 = memref.load %arg2[%c1_14] : memref<32xf32, #tpu.memory_space<smem>>
    %34 = vector.broadcast %33 : f32 to vector<16x128xf32>
    %35 = arith.addf %32, %34 : vector<16x128xf32>
    %cst_15 = arith.constant 0.000000e+00 : f32
    %36 = vector.broadcast %cst_15 : f32 to vector<16x128xf32>
    %37 = arith.maximumf %35, %36 : vector<16x128xf32>
    %c1_16 = arith.constant 1 : index
    %38 = memref.load %arg3[%c1_16] : memref<32xf32, #tpu.memory_space<smem>>
    %39 = vector.broadcast %38 : f32 to vector<16x128xf32>
    %40 = arith.mulf %39, %37 : vector<16x128xf32>
    %41 = arith.addf %29, %40 : vector<16x128xf32>
    %c2_17 = arith.constant 2 : index
    %42 = memref.load %arg1[%c2_17] : memref<32xf32, #tpu.memory_space<smem>>
    %43 = vector.broadcast %42 : f32 to vector<16x128xf32>
    %44 = arith.mulf %43, %13 : vector<16x128xf32>
    %c2_18 = arith.constant 2 : index
    %45 = memref.load %arg2[%c2_18] : memref<32xf32, #tpu.memory_space<smem>>
    %46 = vector.broadcast %45 : f32 to vector<16x128xf32>
    %47 = arith.addf %44, %46 : vector<16x128xf32>
    %cst_19 = arith.constant 0.000000e+00 : f32
    %48 = vector.broadcast %cst_19 : f32 to vector<16x128xf32>
    %49 = arith.maximumf %47, %48 : vector<16x128xf32>
    %c2_20 = arith.constant 2 : index
    %50 = memref.load %arg3[%c2_20] : memref<32xf32, #tpu.memory_space<smem>>
    %51 = vector.broadcast %50 : f32 to vector<16x128xf32>
    %52 = arith.mulf %51, %49 : vector<16x128xf32>
    %53 = arith.addf %41, %52 : vector<16x128xf32>
    %c3 = arith.constant 3 : index
    %54 = memref.load %arg1[%c3] : memref<32xf32, #tpu.memory_space<smem>>
    %55 = vector.broadcast %54 : f32 to vector<16x128xf32>
    %56 = arith.mulf %55, %13 : vector<16x128xf32>
    %c3_21 = arith.constant 3 : index
    %57 = memref.load %arg2[%c3_21] : memref<32xf32, #tpu.memory_space<smem>>
    %58 = vector.broadcast %57 : f32 to vector<16x128xf32>
    %59 = arith.addf %56, %58 : vector<16x128xf32>
    %cst_22 = arith.constant 0.000000e+00 : f32
    %60 = vector.broadcast %cst_22 : f32 to vector<16x128xf32>
    %61 = arith.maximumf %59, %60 : vector<16x128xf32>
    %c3_23 = arith.constant 3 : index
    %62 = memref.load %arg3[%c3_23] : memref<32xf32, #tpu.memory_space<smem>>
    %63 = vector.broadcast %62 : f32 to vector<16x128xf32>
    %64 = arith.mulf %63, %61 : vector<16x128xf32>
    %65 = arith.addf %53, %64 : vector<16x128xf32>
    %c4 = arith.constant 4 : index
    %66 = memref.load %arg1[%c4] : memref<32xf32, #tpu.memory_space<smem>>
    %67 = vector.broadcast %66 : f32 to vector<16x128xf32>
    %68 = arith.mulf %67, %13 : vector<16x128xf32>
    %c4_24 = arith.constant 4 : index
    %69 = memref.load %arg2[%c4_24] : memref<32xf32, #tpu.memory_space<smem>>
    %70 = vector.broadcast %69 : f32 to vector<16x128xf32>
    %71 = arith.addf %68, %70 : vector<16x128xf32>
    %cst_25 = arith.constant 0.000000e+00 : f32
    %72 = vector.broadcast %cst_25 : f32 to vector<16x128xf32>
    %73 = arith.maximumf %71, %72 : vector<16x128xf32>
    %c4_26 = arith.constant 4 : index
    %74 = memref.load %arg3[%c4_26] : memref<32xf32, #tpu.memory_space<smem>>
    %75 = vector.broadcast %74 : f32 to vector<16x128xf32>
    %76 = arith.mulf %75, %73 : vector<16x128xf32>
    %77 = arith.addf %65, %76 : vector<16x128xf32>
    %c5 = arith.constant 5 : index
    %78 = memref.load %arg1[%c5] : memref<32xf32, #tpu.memory_space<smem>>
    %79 = vector.broadcast %78 : f32 to vector<16x128xf32>
    %80 = arith.mulf %79, %13 : vector<16x128xf32>
    %c5_27 = arith.constant 5 : index
    %81 = memref.load %arg2[%c5_27] : memref<32xf32, #tpu.memory_space<smem>>
    %82 = vector.broadcast %81 : f32 to vector<16x128xf32>
    %83 = arith.addf %80, %82 : vector<16x128xf32>
    %cst_28 = arith.constant 0.000000e+00 : f32
    %84 = vector.broadcast %cst_28 : f32 to vector<16x128xf32>
    %85 = arith.maximumf %83, %84 : vector<16x128xf32>
    %c5_29 = arith.constant 5 : index
    %86 = memref.load %arg3[%c5_29] : memref<32xf32, #tpu.memory_space<smem>>
    %87 = vector.broadcast %86 : f32 to vector<16x128xf32>
    %88 = arith.mulf %87, %85 : vector<16x128xf32>
    %89 = arith.addf %77, %88 : vector<16x128xf32>
    %c6 = arith.constant 6 : index
    %90 = memref.load %arg1[%c6] : memref<32xf32, #tpu.memory_space<smem>>
    %91 = vector.broadcast %90 : f32 to vector<16x128xf32>
    %92 = arith.mulf %91, %13 : vector<16x128xf32>
    %c6_30 = arith.constant 6 : index
    %93 = memref.load %arg2[%c6_30] : memref<32xf32, #tpu.memory_space<smem>>
    %94 = vector.broadcast %93 : f32 to vector<16x128xf32>
    %95 = arith.addf %92, %94 : vector<16x128xf32>
    %cst_31 = arith.constant 0.000000e+00 : f32
    %96 = vector.broadcast %cst_31 : f32 to vector<16x128xf32>
    %97 = arith.maximumf %95, %96 : vector<16x128xf32>
    %c6_32 = arith.constant 6 : index
    %98 = memref.load %arg3[%c6_32] : memref<32xf32, #tpu.memory_space<smem>>
    %99 = vector.broadcast %98 : f32 to vector<16x128xf32>
    %100 = arith.mulf %99, %97 : vector<16x128xf32>
    %101 = arith.addf %89, %100 : vector<16x128xf32>
    %c7 = arith.constant 7 : index
    %102 = memref.load %arg1[%c7] : memref<32xf32, #tpu.memory_space<smem>>
    %103 = vector.broadcast %102 : f32 to vector<16x128xf32>
    %104 = arith.mulf %103, %13 : vector<16x128xf32>
    %c7_33 = arith.constant 7 : index
    %105 = memref.load %arg2[%c7_33] : memref<32xf32, #tpu.memory_space<smem>>
    %106 = vector.broadcast %105 : f32 to vector<16x128xf32>
    %107 = arith.addf %104, %106 : vector<16x128xf32>
    %cst_34 = arith.constant 0.000000e+00 : f32
    %108 = vector.broadcast %cst_34 : f32 to vector<16x128xf32>
    %109 = arith.maximumf %107, %108 : vector<16x128xf32>
    %c7_35 = arith.constant 7 : index
    %110 = memref.load %arg3[%c7_35] : memref<32xf32, #tpu.memory_space<smem>>
    %111 = vector.broadcast %110 : f32 to vector<16x128xf32>
    %112 = arith.mulf %111, %109 : vector<16x128xf32>
    %113 = arith.addf %101, %112 : vector<16x128xf32>
    %c8 = arith.constant 8 : index
    %114 = memref.load %arg1[%c8] : memref<32xf32, #tpu.memory_space<smem>>
    %115 = vector.broadcast %114 : f32 to vector<16x128xf32>
    %116 = arith.mulf %115, %13 : vector<16x128xf32>
    %c8_36 = arith.constant 8 : index
    %117 = memref.load %arg2[%c8_36] : memref<32xf32, #tpu.memory_space<smem>>
    %118 = vector.broadcast %117 : f32 to vector<16x128xf32>
    %119 = arith.addf %116, %118 : vector<16x128xf32>
    %cst_37 = arith.constant 0.000000e+00 : f32
    %120 = vector.broadcast %cst_37 : f32 to vector<16x128xf32>
    %121 = arith.maximumf %119, %120 : vector<16x128xf32>
    %c8_38 = arith.constant 8 : index
    %122 = memref.load %arg3[%c8_38] : memref<32xf32, #tpu.memory_space<smem>>
    %123 = vector.broadcast %122 : f32 to vector<16x128xf32>
    %124 = arith.mulf %123, %121 : vector<16x128xf32>
    %125 = arith.addf %113, %124 : vector<16x128xf32>
    %c9 = arith.constant 9 : index
    %126 = memref.load %arg1[%c9] : memref<32xf32, #tpu.memory_space<smem>>
    %127 = vector.broadcast %126 : f32 to vector<16x128xf32>
    %128 = arith.mulf %127, %13 : vector<16x128xf32>
    %c9_39 = arith.constant 9 : index
    %129 = memref.load %arg2[%c9_39] : memref<32xf32, #tpu.memory_space<smem>>
    %130 = vector.broadcast %129 : f32 to vector<16x128xf32>
    %131 = arith.addf %128, %130 : vector<16x128xf32>
    %cst_40 = arith.constant 0.000000e+00 : f32
    %132 = vector.broadcast %cst_40 : f32 to vector<16x128xf32>
    %133 = arith.maximumf %131, %132 : vector<16x128xf32>
    %c9_41 = arith.constant 9 : index
    %134 = memref.load %arg3[%c9_41] : memref<32xf32, #tpu.memory_space<smem>>
    %135 = vector.broadcast %134 : f32 to vector<16x128xf32>
    %136 = arith.mulf %135, %133 : vector<16x128xf32>
    %137 = arith.addf %125, %136 : vector<16x128xf32>
    %c10 = arith.constant 10 : index
    %138 = memref.load %arg1[%c10] : memref<32xf32, #tpu.memory_space<smem>>
    %139 = vector.broadcast %138 : f32 to vector<16x128xf32>
    %140 = arith.mulf %139, %13 : vector<16x128xf32>
    %c10_42 = arith.constant 10 : index
    %141 = memref.load %arg2[%c10_42] : memref<32xf32, #tpu.memory_space<smem>>
    %142 = vector.broadcast %141 : f32 to vector<16x128xf32>
    %143 = arith.addf %140, %142 : vector<16x128xf32>
    %cst_43 = arith.constant 0.000000e+00 : f32
    %144 = vector.broadcast %cst_43 : f32 to vector<16x128xf32>
    %145 = arith.maximumf %143, %144 : vector<16x128xf32>
    %c10_44 = arith.constant 10 : index
    %146 = memref.load %arg3[%c10_44] : memref<32xf32, #tpu.memory_space<smem>>
    %147 = vector.broadcast %146 : f32 to vector<16x128xf32>
    %148 = arith.mulf %147, %145 : vector<16x128xf32>
    %149 = arith.addf %137, %148 : vector<16x128xf32>
    %c11 = arith.constant 11 : index
    %150 = memref.load %arg1[%c11] : memref<32xf32, #tpu.memory_space<smem>>
    %151 = vector.broadcast %150 : f32 to vector<16x128xf32>
    %152 = arith.mulf %151, %13 : vector<16x128xf32>
    %c11_45 = arith.constant 11 : index
    %153 = memref.load %arg2[%c11_45] : memref<32xf32, #tpu.memory_space<smem>>
    %154 = vector.broadcast %153 : f32 to vector<16x128xf32>
    %155 = arith.addf %152, %154 : vector<16x128xf32>
    %cst_46 = arith.constant 0.000000e+00 : f32
    %156 = vector.broadcast %cst_46 : f32 to vector<16x128xf32>
    %157 = arith.maximumf %155, %156 : vector<16x128xf32>
    %c11_47 = arith.constant 11 : index
    %158 = memref.load %arg3[%c11_47] : memref<32xf32, #tpu.memory_space<smem>>
    %159 = vector.broadcast %158 : f32 to vector<16x128xf32>
    %160 = arith.mulf %159, %157 : vector<16x128xf32>
    %161 = arith.addf %149, %160 : vector<16x128xf32>
    %c12 = arith.constant 12 : index
    %162 = memref.load %arg1[%c12] : memref<32xf32, #tpu.memory_space<smem>>
    %163 = vector.broadcast %162 : f32 to vector<16x128xf32>
    %164 = arith.mulf %163, %13 : vector<16x128xf32>
    %c12_48 = arith.constant 12 : index
    %165 = memref.load %arg2[%c12_48] : memref<32xf32, #tpu.memory_space<smem>>
    %166 = vector.broadcast %165 : f32 to vector<16x128xf32>
    %167 = arith.addf %164, %166 : vector<16x128xf32>
    %cst_49 = arith.constant 0.000000e+00 : f32
    %168 = vector.broadcast %cst_49 : f32 to vector<16x128xf32>
    %169 = arith.maximumf %167, %168 : vector<16x128xf32>
    %c12_50 = arith.constant 12 : index
    %170 = memref.load %arg3[%c12_50] : memref<32xf32, #tpu.memory_space<smem>>
    %171 = vector.broadcast %170 : f32 to vector<16x128xf32>
    %172 = arith.mulf %171, %169 : vector<16x128xf32>
    %173 = arith.addf %161, %172 : vector<16x128xf32>
    %c13 = arith.constant 13 : index
    %174 = memref.load %arg1[%c13] : memref<32xf32, #tpu.memory_space<smem>>
    %175 = vector.broadcast %174 : f32 to vector<16x128xf32>
    %176 = arith.mulf %175, %13 : vector<16x128xf32>
    %c13_51 = arith.constant 13 : index
    %177 = memref.load %arg2[%c13_51] : memref<32xf32, #tpu.memory_space<smem>>
    %178 = vector.broadcast %177 : f32 to vector<16x128xf32>
    %179 = arith.addf %176, %178 : vector<16x128xf32>
    %cst_52 = arith.constant 0.000000e+00 : f32
    %180 = vector.broadcast %cst_52 : f32 to vector<16x128xf32>
    %181 = arith.maximumf %179, %180 : vector<16x128xf32>
    %c13_53 = arith.constant 13 : index
    %182 = memref.load %arg3[%c13_53] : memref<32xf32, #tpu.memory_space<smem>>
    %183 = vector.broadcast %182 : f32 to vector<16x128xf32>
    %184 = arith.mulf %183, %181 : vector<16x128xf32>
    %185 = arith.addf %173, %184 : vector<16x128xf32>
    %c14 = arith.constant 14 : index
    %186 = memref.load %arg1[%c14] : memref<32xf32, #tpu.memory_space<smem>>
    %187 = vector.broadcast %186 : f32 to vector<16x128xf32>
    %188 = arith.mulf %187, %13 : vector<16x128xf32>
    %c14_54 = arith.constant 14 : index
    %189 = memref.load %arg2[%c14_54] : memref<32xf32, #tpu.memory_space<smem>>
    %190 = vector.broadcast %189 : f32 to vector<16x128xf32>
    %191 = arith.addf %188, %190 : vector<16x128xf32>
    %cst_55 = arith.constant 0.000000e+00 : f32
    %192 = vector.broadcast %cst_55 : f32 to vector<16x128xf32>
    %193 = arith.maximumf %191, %192 : vector<16x128xf32>
    %c14_56 = arith.constant 14 : index
    %194 = memref.load %arg3[%c14_56] : memref<32xf32, #tpu.memory_space<smem>>
    %195 = vector.broadcast %194 : f32 to vector<16x128xf32>
    %196 = arith.mulf %195, %193 : vector<16x128xf32>
    %197 = arith.addf %185, %196 : vector<16x128xf32>
    %c15 = arith.constant 15 : index
    %198 = memref.load %arg1[%c15] : memref<32xf32, #tpu.memory_space<smem>>
    %199 = vector.broadcast %198 : f32 to vector<16x128xf32>
    %200 = arith.mulf %199, %13 : vector<16x128xf32>
    %c15_57 = arith.constant 15 : index
    %201 = memref.load %arg2[%c15_57] : memref<32xf32, #tpu.memory_space<smem>>
    %202 = vector.broadcast %201 : f32 to vector<16x128xf32>
    %203 = arith.addf %200, %202 : vector<16x128xf32>
    %cst_58 = arith.constant 0.000000e+00 : f32
    %204 = vector.broadcast %cst_58 : f32 to vector<16x128xf32>
    %205 = arith.maximumf %203, %204 : vector<16x128xf32>
    %c15_59 = arith.constant 15 : index
    %206 = memref.load %arg3[%c15_59] : memref<32xf32, #tpu.memory_space<smem>>
    %207 = vector.broadcast %206 : f32 to vector<16x128xf32>
    %208 = arith.mulf %207, %205 : vector<16x128xf32>
    %209 = arith.addf %197, %208 : vector<16x128xf32>
    %c16 = arith.constant 16 : index
    %210 = memref.load %arg1[%c16] : memref<32xf32, #tpu.memory_space<smem>>
    %211 = vector.broadcast %210 : f32 to vector<16x128xf32>
    %212 = arith.mulf %211, %13 : vector<16x128xf32>
    %c16_60 = arith.constant 16 : index
    %213 = memref.load %arg2[%c16_60] : memref<32xf32, #tpu.memory_space<smem>>
    %214 = vector.broadcast %213 : f32 to vector<16x128xf32>
    %215 = arith.addf %212, %214 : vector<16x128xf32>
    %cst_61 = arith.constant 0.000000e+00 : f32
    %216 = vector.broadcast %cst_61 : f32 to vector<16x128xf32>
    %217 = arith.maximumf %215, %216 : vector<16x128xf32>
    %c16_62 = arith.constant 16 : index
    %218 = memref.load %arg3[%c16_62] : memref<32xf32, #tpu.memory_space<smem>>
    %219 = vector.broadcast %218 : f32 to vector<16x128xf32>
    %220 = arith.mulf %219, %217 : vector<16x128xf32>
    %221 = arith.addf %209, %220 : vector<16x128xf32>
    %c17 = arith.constant 17 : index
    %222 = memref.load %arg1[%c17] : memref<32xf32, #tpu.memory_space<smem>>
    %223 = vector.broadcast %222 : f32 to vector<16x128xf32>
    %224 = arith.mulf %223, %13 : vector<16x128xf32>
    %c17_63 = arith.constant 17 : index
    %225 = memref.load %arg2[%c17_63] : memref<32xf32, #tpu.memory_space<smem>>
    %226 = vector.broadcast %225 : f32 to vector<16x128xf32>
    %227 = arith.addf %224, %226 : vector<16x128xf32>
    %cst_64 = arith.constant 0.000000e+00 : f32
    %228 = vector.broadcast %cst_64 : f32 to vector<16x128xf32>
    %229 = arith.maximumf %227, %228 : vector<16x128xf32>
    %c17_65 = arith.constant 17 : index
    %230 = memref.load %arg3[%c17_65] : memref<32xf32, #tpu.memory_space<smem>>
    %231 = vector.broadcast %230 : f32 to vector<16x128xf32>
    %232 = arith.mulf %231, %229 : vector<16x128xf32>
    %233 = arith.addf %221, %232 : vector<16x128xf32>
    %c18 = arith.constant 18 : index
    %234 = memref.load %arg1[%c18] : memref<32xf32, #tpu.memory_space<smem>>
    %235 = vector.broadcast %234 : f32 to vector<16x128xf32>
    %236 = arith.mulf %235, %13 : vector<16x128xf32>
    %c18_66 = arith.constant 18 : index
    %237 = memref.load %arg2[%c18_66] : memref<32xf32, #tpu.memory_space<smem>>
    %238 = vector.broadcast %237 : f32 to vector<16x128xf32>
    %239 = arith.addf %236, %238 : vector<16x128xf32>
    %cst_67 = arith.constant 0.000000e+00 : f32
    %240 = vector.broadcast %cst_67 : f32 to vector<16x128xf32>
    %241 = arith.maximumf %239, %240 : vector<16x128xf32>
    %c18_68 = arith.constant 18 : index
    %242 = memref.load %arg3[%c18_68] : memref<32xf32, #tpu.memory_space<smem>>
    %243 = vector.broadcast %242 : f32 to vector<16x128xf32>
    %244 = arith.mulf %243, %241 : vector<16x128xf32>
    %245 = arith.addf %233, %244 : vector<16x128xf32>
    %c19 = arith.constant 19 : index
    %246 = memref.load %arg1[%c19] : memref<32xf32, #tpu.memory_space<smem>>
    %247 = vector.broadcast %246 : f32 to vector<16x128xf32>
    %248 = arith.mulf %247, %13 : vector<16x128xf32>
    %c19_69 = arith.constant 19 : index
    %249 = memref.load %arg2[%c19_69] : memref<32xf32, #tpu.memory_space<smem>>
    %250 = vector.broadcast %249 : f32 to vector<16x128xf32>
    %251 = arith.addf %248, %250 : vector<16x128xf32>
    %cst_70 = arith.constant 0.000000e+00 : f32
    %252 = vector.broadcast %cst_70 : f32 to vector<16x128xf32>
    %253 = arith.maximumf %251, %252 : vector<16x128xf32>
    %c19_71 = arith.constant 19 : index
    %254 = memref.load %arg3[%c19_71] : memref<32xf32, #tpu.memory_space<smem>>
    %255 = vector.broadcast %254 : f32 to vector<16x128xf32>
    %256 = arith.mulf %255, %253 : vector<16x128xf32>
    %257 = arith.addf %245, %256 : vector<16x128xf32>
    %c20 = arith.constant 20 : index
    %258 = memref.load %arg1[%c20] : memref<32xf32, #tpu.memory_space<smem>>
    %259 = vector.broadcast %258 : f32 to vector<16x128xf32>
    %260 = arith.mulf %259, %13 : vector<16x128xf32>
    %c20_72 = arith.constant 20 : index
    %261 = memref.load %arg2[%c20_72] : memref<32xf32, #tpu.memory_space<smem>>
    %262 = vector.broadcast %261 : f32 to vector<16x128xf32>
    %263 = arith.addf %260, %262 : vector<16x128xf32>
    %cst_73 = arith.constant 0.000000e+00 : f32
    %264 = vector.broadcast %cst_73 : f32 to vector<16x128xf32>
    %265 = arith.maximumf %263, %264 : vector<16x128xf32>
    %c20_74 = arith.constant 20 : index
    %266 = memref.load %arg3[%c20_74] : memref<32xf32, #tpu.memory_space<smem>>
    %267 = vector.broadcast %266 : f32 to vector<16x128xf32>
    %268 = arith.mulf %267, %265 : vector<16x128xf32>
    %269 = arith.addf %257, %268 : vector<16x128xf32>
    %c21 = arith.constant 21 : index
    %270 = memref.load %arg1[%c21] : memref<32xf32, #tpu.memory_space<smem>>
    %271 = vector.broadcast %270 : f32 to vector<16x128xf32>
    %272 = arith.mulf %271, %13 : vector<16x128xf32>
    %c21_75 = arith.constant 21 : index
    %273 = memref.load %arg2[%c21_75] : memref<32xf32, #tpu.memory_space<smem>>
    %274 = vector.broadcast %273 : f32 to vector<16x128xf32>
    %275 = arith.addf %272, %274 : vector<16x128xf32>
    %cst_76 = arith.constant 0.000000e+00 : f32
    %276 = vector.broadcast %cst_76 : f32 to vector<16x128xf32>
    %277 = arith.maximumf %275, %276 : vector<16x128xf32>
    %c21_77 = arith.constant 21 : index
    %278 = memref.load %arg3[%c21_77] : memref<32xf32, #tpu.memory_space<smem>>
    %279 = vector.broadcast %278 : f32 to vector<16x128xf32>
    %280 = arith.mulf %279, %277 : vector<16x128xf32>
    %281 = arith.addf %269, %280 : vector<16x128xf32>
    %c22 = arith.constant 22 : index
    %282 = memref.load %arg1[%c22] : memref<32xf32, #tpu.memory_space<smem>>
    %283 = vector.broadcast %282 : f32 to vector<16x128xf32>
    %284 = arith.mulf %283, %13 : vector<16x128xf32>
    %c22_78 = arith.constant 22 : index
    %285 = memref.load %arg2[%c22_78] : memref<32xf32, #tpu.memory_space<smem>>
    %286 = vector.broadcast %285 : f32 to vector<16x128xf32>
    %287 = arith.addf %284, %286 : vector<16x128xf32>
    %cst_79 = arith.constant 0.000000e+00 : f32
    %288 = vector.broadcast %cst_79 : f32 to vector<16x128xf32>
    %289 = arith.maximumf %287, %288 : vector<16x128xf32>
    %c22_80 = arith.constant 22 : index
    %290 = memref.load %arg3[%c22_80] : memref<32xf32, #tpu.memory_space<smem>>
    %291 = vector.broadcast %290 : f32 to vector<16x128xf32>
    %292 = arith.mulf %291, %289 : vector<16x128xf32>
    %293 = arith.addf %281, %292 : vector<16x128xf32>
    %c23 = arith.constant 23 : index
    %294 = memref.load %arg1[%c23] : memref<32xf32, #tpu.memory_space<smem>>
    %295 = vector.broadcast %294 : f32 to vector<16x128xf32>
    %296 = arith.mulf %295, %13 : vector<16x128xf32>
    %c23_81 = arith.constant 23 : index
    %297 = memref.load %arg2[%c23_81] : memref<32xf32, #tpu.memory_space<smem>>
    %298 = vector.broadcast %297 : f32 to vector<16x128xf32>
    %299 = arith.addf %296, %298 : vector<16x128xf32>
    %cst_82 = arith.constant 0.000000e+00 : f32
    %300 = vector.broadcast %cst_82 : f32 to vector<16x128xf32>
    %301 = arith.maximumf %299, %300 : vector<16x128xf32>
    %c23_83 = arith.constant 23 : index
    %302 = memref.load %arg3[%c23_83] : memref<32xf32, #tpu.memory_space<smem>>
    %303 = vector.broadcast %302 : f32 to vector<16x128xf32>
    %304 = arith.mulf %303, %301 : vector<16x128xf32>
    %305 = arith.addf %293, %304 : vector<16x128xf32>
    %c24 = arith.constant 24 : index
    %306 = memref.load %arg1[%c24] : memref<32xf32, #tpu.memory_space<smem>>
    %307 = vector.broadcast %306 : f32 to vector<16x128xf32>
    %308 = arith.mulf %307, %13 : vector<16x128xf32>
    %c24_84 = arith.constant 24 : index
    %309 = memref.load %arg2[%c24_84] : memref<32xf32, #tpu.memory_space<smem>>
    %310 = vector.broadcast %309 : f32 to vector<16x128xf32>
    %311 = arith.addf %308, %310 : vector<16x128xf32>
    %cst_85 = arith.constant 0.000000e+00 : f32
    %312 = vector.broadcast %cst_85 : f32 to vector<16x128xf32>
    %313 = arith.maximumf %311, %312 : vector<16x128xf32>
    %c24_86 = arith.constant 24 : index
    %314 = memref.load %arg3[%c24_86] : memref<32xf32, #tpu.memory_space<smem>>
    %315 = vector.broadcast %314 : f32 to vector<16x128xf32>
    %316 = arith.mulf %315, %313 : vector<16x128xf32>
    %317 = arith.addf %305, %316 : vector<16x128xf32>
    %c25 = arith.constant 25 : index
    %318 = memref.load %arg1[%c25] : memref<32xf32, #tpu.memory_space<smem>>
    %319 = vector.broadcast %318 : f32 to vector<16x128xf32>
    %320 = arith.mulf %319, %13 : vector<16x128xf32>
    %c25_87 = arith.constant 25 : index
    %321 = memref.load %arg2[%c25_87] : memref<32xf32, #tpu.memory_space<smem>>
    %322 = vector.broadcast %321 : f32 to vector<16x128xf32>
    %323 = arith.addf %320, %322 : vector<16x128xf32>
    %cst_88 = arith.constant 0.000000e+00 : f32
    %324 = vector.broadcast %cst_88 : f32 to vector<16x128xf32>
    %325 = arith.maximumf %323, %324 : vector<16x128xf32>
    %c25_89 = arith.constant 25 : index
    %326 = memref.load %arg3[%c25_89] : memref<32xf32, #tpu.memory_space<smem>>
    %327 = vector.broadcast %326 : f32 to vector<16x128xf32>
    %328 = arith.mulf %327, %325 : vector<16x128xf32>
    %329 = arith.addf %317, %328 : vector<16x128xf32>
    %c26 = arith.constant 26 : index
    %330 = memref.load %arg1[%c26] : memref<32xf32, #tpu.memory_space<smem>>
    %331 = vector.broadcast %330 : f32 to vector<16x128xf32>
    %332 = arith.mulf %331, %13 : vector<16x128xf32>
    %c26_90 = arith.constant 26 : index
    %333 = memref.load %arg2[%c26_90] : memref<32xf32, #tpu.memory_space<smem>>
    %334 = vector.broadcast %333 : f32 to vector<16x128xf32>
    %335 = arith.addf %332, %334 : vector<16x128xf32>
    %cst_91 = arith.constant 0.000000e+00 : f32
    %336 = vector.broadcast %cst_91 : f32 to vector<16x128xf32>
    %337 = arith.maximumf %335, %336 : vector<16x128xf32>
    %c26_92 = arith.constant 26 : index
    %338 = memref.load %arg3[%c26_92] : memref<32xf32, #tpu.memory_space<smem>>
    %339 = vector.broadcast %338 : f32 to vector<16x128xf32>
    %340 = arith.mulf %339, %337 : vector<16x128xf32>
    %341 = arith.addf %329, %340 : vector<16x128xf32>
    %c27 = arith.constant 27 : index
    %342 = memref.load %arg1[%c27] : memref<32xf32, #tpu.memory_space<smem>>
    %343 = vector.broadcast %342 : f32 to vector<16x128xf32>
    %344 = arith.mulf %343, %13 : vector<16x128xf32>
    %c27_93 = arith.constant 27 : index
    %345 = memref.load %arg2[%c27_93] : memref<32xf32, #tpu.memory_space<smem>>
    %346 = vector.broadcast %345 : f32 to vector<16x128xf32>
    %347 = arith.addf %344, %346 : vector<16x128xf32>
    %cst_94 = arith.constant 0.000000e+00 : f32
    %348 = vector.broadcast %cst_94 : f32 to vector<16x128xf32>
    %349 = arith.maximumf %347, %348 : vector<16x128xf32>
    %c27_95 = arith.constant 27 : index
    %350 = memref.load %arg3[%c27_95] : memref<32xf32, #tpu.memory_space<smem>>
    %351 = vector.broadcast %350 : f32 to vector<16x128xf32>
    %352 = arith.mulf %351, %349 : vector<16x128xf32>
    %353 = arith.addf %341, %352 : vector<16x128xf32>
    %c28 = arith.constant 28 : index
    %354 = memref.load %arg1[%c28] : memref<32xf32, #tpu.memory_space<smem>>
    %355 = vector.broadcast %354 : f32 to vector<16x128xf32>
    %356 = arith.mulf %355, %13 : vector<16x128xf32>
    %c28_96 = arith.constant 28 : index
    %357 = memref.load %arg2[%c28_96] : memref<32xf32, #tpu.memory_space<smem>>
    %358 = vector.broadcast %357 : f32 to vector<16x128xf32>
    %359 = arith.addf %356, %358 : vector<16x128xf32>
    %cst_97 = arith.constant 0.000000e+00 : f32
    %360 = vector.broadcast %cst_97 : f32 to vector<16x128xf32>
    %361 = arith.maximumf %359, %360 : vector<16x128xf32>
    %c28_98 = arith.constant 28 : index
    %362 = memref.load %arg3[%c28_98] : memref<32xf32, #tpu.memory_space<smem>>
    %363 = vector.broadcast %362 : f32 to vector<16x128xf32>
    %364 = arith.mulf %363, %361 : vector<16x128xf32>
    %365 = arith.addf %353, %364 : vector<16x128xf32>
    %c29 = arith.constant 29 : index
    %366 = memref.load %arg1[%c29] : memref<32xf32, #tpu.memory_space<smem>>
    %367 = vector.broadcast %366 : f32 to vector<16x128xf32>
    %368 = arith.mulf %367, %13 : vector<16x128xf32>
    %c29_99 = arith.constant 29 : index
    %369 = memref.load %arg2[%c29_99] : memref<32xf32, #tpu.memory_space<smem>>
    %370 = vector.broadcast %369 : f32 to vector<16x128xf32>
    %371 = arith.addf %368, %370 : vector<16x128xf32>
    %cst_100 = arith.constant 0.000000e+00 : f32
    %372 = vector.broadcast %cst_100 : f32 to vector<16x128xf32>
    %373 = arith.maximumf %371, %372 : vector<16x128xf32>
    %c29_101 = arith.constant 29 : index
    %374 = memref.load %arg3[%c29_101] : memref<32xf32, #tpu.memory_space<smem>>
    %375 = vector.broadcast %374 : f32 to vector<16x128xf32>
    %376 = arith.mulf %375, %373 : vector<16x128xf32>
    %377 = arith.addf %365, %376 : vector<16x128xf32>
    %c30 = arith.constant 30 : index
    %378 = memref.load %arg1[%c30] : memref<32xf32, #tpu.memory_space<smem>>
    %379 = vector.broadcast %378 : f32 to vector<16x128xf32>
    %380 = arith.mulf %379, %13 : vector<16x128xf32>
    %c30_102 = arith.constant 30 : index
    %381 = memref.load %arg2[%c30_102] : memref<32xf32, #tpu.memory_space<smem>>
    %382 = vector.broadcast %381 : f32 to vector<16x128xf32>
    %383 = arith.addf %380, %382 : vector<16x128xf32>
    %cst_103 = arith.constant 0.000000e+00 : f32
    %384 = vector.broadcast %cst_103 : f32 to vector<16x128xf32>
    %385 = arith.maximumf %383, %384 : vector<16x128xf32>
    %c30_104 = arith.constant 30 : index
    %386 = memref.load %arg3[%c30_104] : memref<32xf32, #tpu.memory_space<smem>>
    %387 = vector.broadcast %386 : f32 to vector<16x128xf32>
    %388 = arith.mulf %387, %385 : vector<16x128xf32>
    %389 = arith.addf %377, %388 : vector<16x128xf32>
    %c31 = arith.constant 31 : index
    %390 = memref.load %arg1[%c31] : memref<32xf32, #tpu.memory_space<smem>>
    %391 = vector.broadcast %390 : f32 to vector<16x128xf32>
    %392 = arith.mulf %391, %13 : vector<16x128xf32>
    %c31_105 = arith.constant 31 : index
    %393 = memref.load %arg2[%c31_105] : memref<32xf32, #tpu.memory_space<smem>>
    %394 = vector.broadcast %393 : f32 to vector<16x128xf32>
    %395 = arith.addf %392, %394 : vector<16x128xf32>
    %cst_106 = arith.constant 0.000000e+00 : f32
    %396 = vector.broadcast %cst_106 : f32 to vector<16x128xf32>
    %397 = arith.maximumf %395, %396 : vector<16x128xf32>
    %c31_107 = arith.constant 31 : index
    %398 = memref.load %arg3[%c31_107] : memref<32xf32, #tpu.memory_space<smem>>
    %399 = vector.broadcast %398 : f32 to vector<16x128xf32>
    %400 = arith.mulf %399, %397 : vector<16x128xf32>
    %401 = arith.addf %389, %400 : vector<16x128xf32>
    %cst_108 = arith.constant 9.99999974E-6 : f32
    %402 = vector.broadcast %cst_108 : f32 to vector<16x128xf32>
    %403 = arith.addf %13, %402 : vector<16x128xf32>
    %404 = tpu.reciprocal %403 {approx = true} : vector<16x128xf32> -> vector<16x128xf32>
    %405 = arith.mulf %403, %404 : vector<16x128xf32>
    %cst_109 = arith.constant 2.000000e+00 : f32
    %406 = vector.broadcast %cst_109 : f32 to vector<16x128xf32>
    %407 = arith.subf %406, %405 : vector<16x128xf32>
    %408 = arith.mulf %404, %407 : vector<16x128xf32>
    %409 = arith.mulf %401, %408 : vector<16x128xf32>
    %410 = arith.mulf %409, %7 : vector<16x128xf32>
    %411 = arith.mulf %1, %410 : vector<16x128xf32>
    %412 = arith.mulf %3, %410 : vector<16x128xf32>
    %413 = arith.mulf %5, %410 : vector<16x128xf32>
    %cst_110 = arith.constant dense<0.000000e+00> : vector<16xf32>
    %414 = vector.multi_reduction <add>, %411, %cst_110 [1] : vector<16x128xf32> to vector<16xf32>
    %415 = vector.shape_cast %414 : vector<16xf32> to vector<16x1xf32>
    %cst_111 = arith.constant 7.812500e-03 : f32
    %416 = vector.broadcast %cst_111 : f32 to vector<16x1xf32>
    %417 = arith.mulf %415, %416 : vector<16x1xf32>
    %418 = vector.broadcast %417 : vector<16x1xf32> to vector<16x128xf32>
    %419 = arith.subf %411, %418 : vector<16x128xf32>
    %c0_112 = arith.constant 0 : index
    %c0_113 = arith.constant 0 : index
    %c0_114 = arith.constant 0 : index
    %420 = vector.load %arg7[%c0_112, %c0_113, %c0_114] : memref<3x16x128xf32, #tpu.memory_space<vmem>>, vector<1x16x128xf32>
    %421 = vector.shape_cast %420 : vector<1x16x128xf32> to vector<16x128xf32>
    %422 = vector.shape_cast %419 : vector<16x128xf32> to vector<1x16x128xf32>
    tpu.vector_store %arg7[%c0_112, %c0_113, %c0_114], %422 {strides = array<i32>} : memref<3x16x128xf32, #tpu.memory_space<vmem>>, vector<1x16x128xf32>,
    %cst_115 = arith.constant dense<0.000000e+00> : vector<16xf32>
    %423 = vector.multi_reduction <add>, %412, %cst_115 [1] : vector<16x128xf32> to vector<16xf32>
    %424 = vector.shape_cast %423 : vector<16xf32> to vector<16x1xf32>
    %cst_116 = arith.constant 7.812500e-03 : f32
    %425 = vector.broadcast %cst_116 : f32 to vector<16x1xf32>
    %426 = arith.mulf %424, %425 : vector<16x1xf32>
    %427 = vector.broadcast %426 : vector<16x1xf32> to vector<16x128xf32>
    %428 = arith.subf %412, %427 : vector<16x128xf32>
    %c1_117 = arith.constant 1 : index
    %c0_118 = arith.constant 0 : index
    %c0_119 = arith.constant 0 : index
    %429 = vector.load %arg7[%c1_117, %c0_118, %c0_119] : memref<3x16x128xf32, #tpu.memory_space<vmem>>, vector<1x16x128xf32>
    %430 = vector.shape_cast %429 : vector<1x16x128xf32> to vector<16x128xf32>
    %431 = vector.shape_cast %428 : vector<16x128xf32> to vector<1x16x128xf32>
    tpu.vector_store %arg7[%c1_117, %c0_118, %c0_119], %431 {strides = array<i32>} : memref<3x16x128xf32, #tpu.memory_space<vmem>>, vector<1x16x128xf32>,
    %cst_120 = arith.constant dense<0.000000e+00> : vector<16xf32>
    %432 = vector.multi_reduction <add>, %413, %cst_120 [1] : vector<16x128xf32> to vector<16xf32>
    %433 = vector.shape_cast %432 : vector<16xf32> to vector<16x1xf32>
    %cst_121 = arith.constant 7.812500e-03 : f32
    %434 = vector.broadcast %cst_121 : f32 to vector<16x1xf32>
    %435 = arith.mulf %433, %434 : vector<16x1xf32>
    %436 = vector.broadcast %435 : vector<16x1xf32> to vector<16x128xf32>
    %437 = arith.subf %413, %436 : vector<16x128xf32>
    %c2_122 = arith.constant 2 : index
    %c0_123 = arith.constant 0 : index
    %c0_124 = arith.constant 0 : index
    %438 = vector.load %arg7[%c2_122, %c0_123, %c0_124] : memref<3x16x128xf32, #tpu.memory_space<vmem>>, vector<1x16x128xf32>
    %439 = vector.shape_cast %438 : vector<1x16x128xf32> to vector<16x128xf32>
    %440 = vector.shape_cast %437 : vector<16x128xf32> to vector<1x16x128xf32>
    tpu.vector_store %arg7[%c2_122, %c0_123, %c0_124], %440 {strides = array<i32>} : memref<3x16x128xf32, #tpu.memory_space<vmem>>, vector<1x16x128xf32>,
    return
  }
  func.func @transform_0(%arg0: i32) -> i32 {
    %c0_i32 = arith.constant 0 : i32
    %c0_i32_0 = arith.constant 0 : i32
    return %c0_i32 : i32
  }
  func.func @transform_1(%arg0: i32) -> i32 {
    %c0_i32 = arith.constant 0 : i32
    %c0_i32_0 = arith.constant 0 : i32
    return %c0_i32 : i32
  }
  func.func @transform_2(%arg0: i32) -> i32 {
    %c0_i32 = arith.constant 0 : i32
    %c0_i32_0 = arith.constant 0 : i32
    return %c0_i32 : i32
  }
  func.func @transform_3(%arg0: i32) -> i32 {
    %c0_i32 = arith.constant 0 : i32
    %c0_i32_0 = arith.constant 0 : i32
    return %c0_i32 : i32
  }
  func.func @transform_4(%arg0: i32) -> (i32, i32, i32) {
    %c0_i32 = arith.constant 0 : i32
    %c0_i32_0 = arith.constant 0 : i32
    %c0_i32_1 = arith.constant 0 : i32
    return %c0_i32, %arg0, %c0_i32_0 : i32, i32, i32
  }
  func.func @transform_5(%arg0: i32) -> (i32, i32) {
    %c0_i32 = arith.constant 0 : i32
    %c0_i32_0 = arith.constant 0 : i32
    return %arg0, %c0_i32 : i32, i32
  }
  func.func @transform_6(%arg0: i32) -> (i32, i32, i32) {
    %c0_i32 = arith.constant 0 : i32
    %c0_i32_0 = arith.constant 0 : i32
    %c0_i32_1 = arith.constant 0 : i32
    return %c0_i32, %arg0, %c0_i32_0 : i32, i32, i32
  }
}

</mosaic_0001>

<llo_original>
// kernel: tpu_custom_call.1
$region0: #{tpu_custom_call.1}
  #allocation0 [shape = 'u32[]', space=smem, size = 0x4, offset = 0x4, fixed_abs, tag = 'smem constant byte address 0x4 - core index']
  #allocation1 [shape = 'u32[144,128]{1,0:T(1,128)}', space=vmem, size = 0x12000, scoped, tag = 'internal scratch']
  #allocation2 [shape = 'f32[1]{0:T(128)S(6)}', space=smem, size = 0x200, scoped, tag = 'scoped memory for tpu_custom_call.1']
  %s0 = inlined_call_operand.vmem [shape: f32[32], index: 0, kind: input, shape index: {}]
  %s1 = inlined_call_operand.hbm [shape: f32[32], index: 1, kind: input, shape index: {}]
  %s2 = inlined_call_operand.hbm [shape: f32[32], index: 2, kind: input, shape index: {}]
  %s3 = inlined_call_operand.<no memory space> [shape: f32[1], index: 3, kind: input, shape index: {}]
  %s4 = inlined_call_operand.hbm [shape: f32[3,16,128], index: 4, kind: input, shape index: {}]
  %s5 = inlined_call_operand.vmem [shape: bf16[16,128], index: 5, kind: input, shape index: {}]
  %s6 = inlined_call_operand.hbm [shape: f32[3,16,128], index: 6, kind: output, shape index: {}]
  %s7 = sld [smem:[#allocation0]]
  $region50: #{tpu_custom_call.1} parent=0
    _
  %s9 = ssub.s32 1, %s7
  %s10 = scalar_select 0, %s9, %s7
  %11 = sst [smem:[#allocation2]] %s3
  $region1: #{tpu_custom_call.1} parent=0
    #allocation3 [shape = 'u8[512]{0}', space=smem, size = 0x200, scoped, tag = 'input window, operand 0, single buffered']
    #allocation4 [shape = 's32[1]{0}', space=sflag, size = 0x4, scoped, tag = 'scoped memory for tpu_custom_call.1']
    #allocation5 [shape = 's32[1]{0}', space=sflag, size = 0x4, scoped, tag = 'scoped memory for tpu_custom_call.1']
    #allocation6 [shape = 's32[1]{0}', space=sflag, size = 0x4, scoped, tag = 'scoped memory for tpu_custom_call.1']
    #allocation7 [shape = 's32[1]{0}', space=sflag, size = 0x4, scoped, tag = 'scoped memory for tpu_custom_call.1']
    #allocation8 [shape = 'u8[512]{0}', space=smem, size = 0x200, scoped, tag = 'input window, operand 1, single buffered']
    #allocation9 [shape = 'u8[512]{0}', space=smem, size = 0x200, scoped, tag = 'input window, operand 2, single buffered']
    #allocation10 [shape = 's32[1]{0}', space=sflag, size = 0x4, scoped, tag = 'scoped memory for tpu_custom_call.1']
    #allocation11 [shape = 'u8[24576]{0}', space=vmem, size = 0x6000, scoped, tag = 'input window, operand 4, single buffered']
    #allocation12 [shape = 'u8[24576]{0}', space=vmem, size = 0x6000, scoped, tag = 'output window, operand 0, single buffered']
    %12 = vsyncpa [#allocation7], 0
    %13 = vsyncpa [#allocation6], 0
    %14 = vsyncpa [#allocation10], 0
    %15 = vsyncpa [#allocation4], 0
    %16 = vsyncpa [#allocation5], 0
    // Predicated region
    $region2: #{tpu_custom_call.1} parent=1 // pred_check
      _
    $region3: #{tpu_custom_call.1} parent=1 // pred_check_branch
      %18 = sbr.rel (0) target = $region5
    $region4: #{tpu_custom_call.1} parent=1 // pred_region
      %s20 = ssub.s32 16, 16
      %21 = vsyncadd [#allocation7], %s20
      %s23 = sshll.u32 %s0, 4
      %s24 = int_to_ptr.vmem [resolvable:$true] %s23
      %26 = dma.vmem_to_smem %s24, 16, [#allocation3], [#allocation7]
    $region5: #{tpu_custom_call.1} parent=1 // pred_fallthru
      _
    // Predicated region
    $region6: #{tpu_custom_call.1} parent=1 // pred_check
      _
    $region7: #{tpu_custom_call.1} parent=1 // pred_check_branch
      %28 = sbr.rel (0) target = $region9
    $region8: #{tpu_custom_call.1} parent=1 // pred_region
      %s30 = ssub.s32 16, 16
      %31 = vsyncadd [#allocation6], %s30
      %34 = dma.hbm_to_smem %s1, 16, [#allocation8], [#allocation6]
    $region9: #{tpu_custom_call.1} parent=1 // pred_fallthru
      _
    // Predicated region
    $region10: #{tpu_custom_call.1} parent=1 // pred_check
      _
    $region11: #{tpu_custom_call.1} parent=1 // pred_check_branch
      %36 = sbr.rel (0) target = $region13
    $region12: #{tpu_custom_call.1} parent=1 // pred_region
      %s38 = ssub.s32 16, 16
      %39 = vsyncadd [#allocation10], %s38
      %42 = dma.hbm_to_smem %s2, 16, [#allocation9], [#allocation10]
    $region13: #{tpu_custom_call.1} parent=1 // pred_fallthru
      _
    // Predicated region
    $region14: #{tpu_custom_call.1} parent=1 // pred_check
      _
    $region15: #{tpu_custom_call.1} parent=1 // pred_check_branch
      %44 = sbr.rel (0) target = $region17
    $region16: #{tpu_custom_call.1} parent=1 // pred_region
      _
    $region17: #{tpu_custom_call.1} parent=1 // pred_fallthru
      _
    // Predicated region
    $region18: #{tpu_custom_call.1} parent=1 // pred_check
      _
    $region19: #{tpu_custom_call.1} parent=1 // pred_check_branch
      %46 = sbr.rel (0) target = $region21
    $region20: #{tpu_custom_call.1} parent=1 // pred_region
      %s48 = ssub.s32 768, 768
      %49 = vsyncadd [#allocation4], %s48
      %s50 = sshll.u32 [#allocation11], 4
      %s51 = int_to_ptr.vmem [resolvable:$true] %s50
      %56 = dma.hbm_to_vmem [thread:$0]  %s4, 768, %s51, [#allocation4], 128, 128, 8
    $region21: #{tpu_custom_call.1} parent=1 // pred_fallthru
      _
    // Predicated region
    $region22: #{tpu_custom_call.1} parent=1 // pred_check
      _
    $region23: #{tpu_custom_call.1} parent=1 // pred_check_branch
      %58 = sbr.rel (0) target = $region25
    $region24: #{tpu_custom_call.1} parent=1 // pred_region
      _
    $region25: #{tpu_custom_call.1} parent=1 // pred_fallthru
      _
    // Predicated region
    $region26: #{tpu_custom_call.1} parent=1 // pred_check
      _
    $region27: #{tpu_custom_call.1} parent=1 // pred_check_branch
      %60 = sbr.rel (0) target = $region29
    $region28: #{tpu_custom_call.1} parent=1 // pred_region
      %61 = dma.done [#allocation7], 16
    $region29: #{tpu_custom_call.1} parent=1 // pred_fallthru
      _
    // Predicated region
    $region30: #{tpu_custom_call.1} parent=1 // pred_check
      _
    $region31: #{tpu_custom_call.1} parent=1 // pred_check_branch
      %63 = sbr.rel (0) target = $region33
    $region32: #{tpu_custom_call.1} parent=1 // pred_region
      %64 = dma.done [#allocation6], 16
    $region33: #{tpu_custom_call.1} parent=1 // pred_fallthru
      _
    // Predicated region
    $region34: #{tpu_custom_call.1} parent=1 // pred_check
      _
    $region35: #{tpu_custom_call.1} parent=1 // pred_check_branch
      %66 = sbr.rel (0) target = $region37
    $region36: #{tpu_custom_call.1} parent=1 // pred_region
      %67 = dma.done [#allocation10], 16
    $region37: #{tpu_custom_call.1} parent=1 // pred_fallthru
      _
    // Predicated region
    $region38: #{tpu_custom_call.1} parent=1 // pred_check
      _
    $region39: #{tpu_custom_call.1} parent=1 // pred_check_branch
      %69 = sbr.rel (0) target = $region41
    $region40: #{tpu_custom_call.1} parent=1 // pred_region
      %70 = dma.done [#allocation4], 768
    $region41: #{tpu_custom_call.1} parent=1 // pred_fallthru
      _
    %71 = sfence
    %v72 = vld [vmem:[#allocation11] sm:$0xff]
    %v73 = vld [vmem:[#allocation11 + $0x8] sm:$0xff]
    %s74 = scalar_lea.vmem [#allocation11], 16
    %v75 = vld [vmem:[%s74] sm:$0xff]
    %v76 = vld [vmem:[%s74 + $0x8] sm:$0xff]
    %s77 = scalar_lea.vmem [#allocation11], 32
    %v78 = vld [vmem:[%s77] sm:$0xff]
    %v79 = vld [vmem:[%s77 + $0x8] sm:$0xff]
    %v80 = vld [vmem:[%s5] sm:$0xf]
    %v81 = vld [vmem:[%s5 + $0x4] sm:$0xf]
    %v82 = vunpack.c.l.bf16 %v80
    %v83 = vunpack.c.l.bf16 %v81
    %v84 = vmul.f32 %v72, %v72
    %v85 = vmul.f32 %v73, %v73
    %v86 = vmul.f32 %v75, %v75
    %v87 = vmul.f32 %v76, %v76
    %v88 = vadd.f32 %v84, %v86
    %v89 = vadd.f32 %v85, %v87
    %v90 = vmul.f32 %v78, %v78
    %v91 = vmul.f32 %v79, %v79
    %v92 = vadd.f32 %v88, %v90
    %v93 = vadd.f32 %v89, %v91
    %v94 = vrsqrt.pop %v92
    %v95 = vmul.f32 %v92, %v94
    %vm96 = vcmp.eq.f32.partialorder %v92, inf
    %v97 = vsel %vm96, %v92, %v95
    %vm98 = vcmp.eq.f32.partialorder %v92, 0.0
    %v99 = vand.u32 %v92, 2147483648
    %v100 = vsel %vm98, %v99, %v97
    %v101 = vrsqrt.pop %v93
    %v102 = vmul.f32 %v93, %v101
    %vm103 = vcmp.eq.f32.partialorder %v93, inf
    %v104 = vsel %vm103, %v93, %v102
    %vm105 = vcmp.eq.f32.partialorder %v93, 0.0
    %v106 = vand.u32 %v93, 2147483648
    %v107 = vsel %vm105, %v106, %v104
    %s108 = sld [smem:[#allocation2]]
    %v109 = vstv %s108
    %v110 = vadd.f32 %v109, 0.0
    %s111 = sld [smem:[#allocation3]]
    %v112 = vstv %s111
    %v113 = vmul.f32 %v112, %v100
    %v114 = vmul.f32 %v112, %v107
    %s115 = sld [smem:[#allocation8]]
    %v116 = vstv %s115
    %v117 = vadd.f32 %v113, %v116
    %v118 = vadd.f32 %v114, %v116
    %v119 = vmax.f32 %v117, 0.0
    %v120 = vmax.f32 %v118, 0.0
    %s121 = sld [smem:[#allocation9]]
    %v122 = vstv %s121
    %v123 = vmul.f32 %v122, %v119
    %v124 = vmul.f32 %v122, %v120
    %v125 = vadd.f32 %v110, %v123
    %v126 = vadd.f32 %v110, %v124
    %s127 = sld [smem:[#allocation3 + $0x1]]
    %v128 = vstv %s127
    %v129 = vmul.f32 %v128, %v100
    %v130 = vmul.f32 %v128, %v107
    %s131 = sld [smem:[#allocation8 + $0x1]]
    %v132 = vstv %s131
    %v133 = vadd.f32 %v129, %v132
    %v134 = vadd.f32 %v130, %v132
    %v135 = vmax.f32 %v133, 0.0
    %v136 = vmax.f32 %v134, 0.0
    %s137 = sld [smem:[#allocation9 + $0x1]]
    %v138 = vstv %s137
    %v139 = vmul.f32 %v138, %v135
    %v140 = vmul.f32 %v138, %v136
    %v141 = vadd.f32 %v125, %v139
    %v142 = vadd.f32 %v126, %v140
    %s143 = sld [smem:[#allocation3 + $0x2]]
    %v144 = vstv %s143
    %v145 = vmul.f32 %v144, %v100
    %v146 = vmul.f32 %v144, %v107
    %s147 = sld [smem:[#allocation8 + $0x2]]
    %v148 = vstv %s147
    %v149 = vadd.f32 %v145, %v148
    %v150 = vadd.f32 %v146, %v148
    %v151 = vmax.f32 %v149, 0.0
    %v152 = vmax.f32 %v150, 0.0
    %s153 = sld [smem:[#allocation9 + $0x2]]
    %v154 = vstv %s153
    %v155 = vmul.f32 %v154, %v151
    %v156 = vmul.f32 %v154, %v152
    %v157 = vadd.f32 %v141, %v155
    %v158 = vadd.f32 %v142, %v156
    %s159 = sld [smem:[#allocation3 + $0x3]]
    %v160 = vstv %s159
    %v161 = vmul.f32 %v160, %v100
    %v162 = vmul.f32 %v160, %v107
    %s163 = sld [smem:[#allocation8 + $0x3]]
    %v164 = vstv %s163
    %v165 = vadd.f32 %v161, %v164
    %v166 = vadd.f32 %v162, %v164
    %v167 = vmax.f32 %v165, 0.0
    %v168 = vmax.f32 %v166, 0.0
    %s169 = sld [smem:[#allocation9 + $0x3]]
    %v170 = vstv %s169
    %v171 = vmul.f32 %v170, %v167
    %v172 = vmul.f32 %v170, %v168
    %v173 = vadd.f32 %v157, %v171
    %v174 = vadd.f32 %v158, %v172
    %s175 = sld [smem:[#allocation3 + $0x4]]
    %v176 = vstv %s175
    %v177 = vmul.f32 %v176, %v100
    %v178 = vmul.f32 %v176, %v107
    %s179 = sld [smem:[#allocation8 + $0x4]]
    %v180 = vstv %s179
    %v181 = vadd.f32 %v177, %v180
    %v182 = vadd.f32 %v178, %v180
    %v183 = vmax.f32 %v181, 0.0
    %v184 = vmax.f32 %v182, 0.0
    %s185 = sld [smem:[#allocation9 + $0x4]]
    %v186 = vstv %s185
    %v187 = vmul.f32 %v186, %v183
    %v188 = vmul.f32 %v186, %v184
    %v189 = vadd.f32 %v173, %v187
    %v190 = vadd.f32 %v174, %v188
    %s191 = sld [smem:[#allocation3 + $0x5]]
    %v192 = vstv %s191
    %v193 = vmul.f32 %v192, %v100
    %v194 = vmul.f32 %v192, %v107
    %s195 = sld [smem:[#allocation8 + $0x5]]
    %v196 = vstv %s195
    %v197 = vadd.f32 %v193, %v196
    %v198 = vadd.f32 %v194, %v196
    %v199 = vmax.f32 %v197, 0.0
    %v200 = vmax.f32 %v198, 0.0
    %s201 = sld [smem:[#allocation9 + $0x5]]
    %v202 = vstv %s201
    %v203 = vmul.f32 %v202, %v199
    %v204 = vmul.f32 %v202, %v200
    %v205 = vadd.f32 %v189, %v203
    %v206 = vadd.f32 %v190, %v204
    %s207 = sld [smem:[#allocation3 + $0x6]]
    %v208 = vstv %s207
    %v209 = vmul.f32 %v208, %v100
    %v210 = vmul.f32 %v208, %v107
    %s211 = sld [smem:[#allocation8 + $0x6]]
    %v212 = vstv %s211
    %v213 = vadd.f32 %v209, %v212
    %v214 = vadd.f32 %v210, %v212
    %v215 = vmax.f32 %v213, 0.0
    %v216 = vmax.f32 %v214, 0.0
    %s217 = sld [smem:[#allocation9 + $0x6]]
    %v218 = vstv %s217
    %v219 = vmul.f32 %v218, %v215
    %v220 = vmul.f32 %v218, %v216
    %v221 = vadd.f32 %v205, %v219
    %v222 = vadd.f32 %v206, %v220
    %s223 = sld [smem:[#allocation3 + $0x7]]
    %v224 = vstv %s223
    %v225 = vmul.f32 %v224, %v100
    %v226 = vmul.f32 %v224, %v107
    %s227 = sld [smem:[#allocation8 + $0x7]]
    %v228 = vstv %s227
    %v229 = vadd.f32 %v225, %v228
    %v230 = vadd.f32 %v226, %v228
    %v231 = vmax.f32 %v229, 0.0
    %v232 = vmax.f32 %v230, 0.0
    %s233 = sld [smem:[#allocation9 + $0x7]]
    %v234 = vstv %s233
    %v235 = vmul.f32 %v234, %v231
    %v236 = vmul.f32 %v234, %v232
    %v237 = vadd.f32 %v221, %v235
    %v238 = vadd.f32 %v222, %v236
    %s239 = sld [smem:[#allocation3 + $0x8]]
    %v240 = vstv %s239
    %v241 = vmul.f32 %v240, %v100
    %v242 = vmul.f32 %v240, %v107
    %s243 = sld [smem:[#allocation8 + $0x8]]
    %v244 = vstv %s243
    %v245 = vadd.f32 %v241, %v244
    %v246 = vadd.f32 %v242, %v244
    %v247 = vmax.f32 %v245, 0.0
    %v248 = vmax.f32 %v246, 0.0
    %s249 = sld [smem:[#allocation9 + $0x8]]
    %v250 = vstv %s249
    %v251 = vmul.f32 %v250, %v247
    %v252 = vmul.f32 %v250, %v248
    %v253 = vadd.f32 %v237, %v251
    %v254 = vadd.f32 %v238, %v252
    %s255 = sld [smem:[#allocation3 + $0x9]]
    %v256 = vstv %s255
    %v257 = vmul.f32 %v256, %v100
    %v258 = vmul.f32 %v256, %v107
    %s259 = sld [smem:[#allocation8 + $0x9]]
    %v260 = vstv %s259
    %v261 = vadd.f32 %v257, %v260
    %v262 = vadd.f32 %v258, %v260
    %v263 = vmax.f32 %v261, 0.0
    %v264 = vmax.f32 %v262, 0.0
    %s265 = sld [smem:[#allocation9 + $0x9]]
    %v266 = vstv %s265
    %v267 = vmul.f32 %v266, %v263
    %v268 = vmul.f32 %v266, %v264
    %v269 = vadd.f32 %v253, %v267
    %v270 = vadd.f32 %v254, %v268
    %s271 = sld [smem:[#allocation3 + $0xa]]
    %v272 = vstv %s271
    %v273 = vmul.f32 %v272, %v100
    %v274 = vmul.f32 %v272, %v107
    %s275 = sld [smem:[#allocation8 + $0xa]]
    %v276 = vstv %s275
    %v277 = vadd.f32 %v273, %v276
    %v278 = vadd.f32 %v274, %v276
    %v279 = vmax.f32 %v277, 0.0
    %v280 = vmax.f32 %v278, 0.0
    %s281 = sld [smem:[#allocation9 + $0xa]]
    %v282 = vstv %s281
    %v283 = vmul.f32 %v282, %v279
    %v284 = vmul.f32 %v282, %v280
    %v285 = vadd.f32 %v269, %v283
    %v286 = vadd.f32 %v270, %v284
    %s287 = sld [smem:[#allocation3 + $0xb]]
    %v288 = vstv %s287
    %v289 = vmul.f32 %v288, %v100
    %v290 = vmul.f32 %v288, %v107
    %s291 = sld [smem:[#allocation8 + $0xb]]
    %v292 = vstv %s291
    %v293 = vadd.f32 %v289, %v292
    %v294 = vadd.f32 %v290, %v292
    %v295 = vmax.f32 %v293, 0.0
    %v296 = vmax.f32 %v294, 0.0
    %s297 = sld [smem:[#allocation9 + $0xb]]
    %v298 = vstv %s297
    %v299 = vmul.f32 %v298, %v295
    %v300 = vmul.f32 %v298, %v296
    %v301 = vadd.f32 %v285, %v299
    %v302 = vadd.f32 %v286, %v300
    %s303 = sld [smem:[#allocation3 + $0xc]]
    %v304 = vstv %s303
    %v305 = vmul.f32 %v304, %v100
    %v306 = vmul.f32 %v304, %v107
    %s307 = sld [smem:[#allocation8 + $0xc]]
    %v308 = vstv %s307
    %v309 = vadd.f32 %v305, %v308
    %v310 = vadd.f32 %v306, %v308
    %v311 = vmax.f32 %v309, 0.0
    %v312 = vmax.f32 %v310, 0.0
    %s313 = sld [smem:[#allocation9 + $0xc]]
    %v314 = vstv %s313
    %v315 = vmul.f32 %v314, %v311
    %v316 = vmul.f32 %v314, %v312
    %v317 = vadd.f32 %v301, %v315
    %v318 = vadd.f32 %v302, %v316
    %s319 = sld [smem:[#allocation3 + $0xd]]
    %v320 = vstv %s319
    %v321 = vmul.f32 %v320, %v100
    %v322 = vmul.f32 %v320, %v107
    %s323 = sld [smem:[#allocation8 + $0xd]]
    %v324 = vstv %s323
    %v325 = vadd.f32 %v321, %v324
    %v326 = vadd.f32 %v322, %v324
    %v327 = vmax.f32 %v325, 0.0
    %v328 = vmax.f32 %v326, 0.0
    %s329 = sld [smem:[#allocation9 + $0xd]]
    %v330 = vstv %s329
    %v331 = vmul.f32 %v330, %v327
    %v332 = vmul.f32 %v330, %v328
    %v333 = vadd.f32 %v317, %v331
    %v334 = vadd.f32 %v318, %v332
    %s335 = sld [smem:[#allocation3 + $0xe]]
    %v336 = vstv %s335
    %v337 = vmul.f32 %v336, %v100
    %v338 = vmul.f32 %v336, %v107
    %s339 = sld [smem:[#allocation8 + $0xe]]
    %v340 = vstv %s339
    %v341 = vadd.f32 %v337, %v340
    %v342 = vadd.f32 %v338, %v340
    %v343 = vmax.f32 %v341, 0.0
    %v344 = vmax.f32 %v342, 0.0
    %s345 = sld [smem:[#allocation9 + $0xe]]
    %v346 = vstv %s345
    %v347 = vmul.f32 %v346, %v343
    %v348 = vmul.f32 %v346, %v344
    %v349 = vadd.f32 %v333, %v347
    %v350 = vadd.f32 %v334, %v348
    %s351 = sld [smem:[#allocation3 + $0xf]]
    %v352 = vstv %s351
    %v353 = vmul.f32 %v352, %v100
    %v354 = vmul.f32 %v352, %v107
    %s355 = sld [smem:[#allocation8 + $0xf]]
    %v356 = vstv %s355
    %v357 = vadd.f32 %v353, %v356
    %v358 = vadd.f32 %v354, %v356
    %v359 = vmax.f32 %v357, 0.0
    %v360 = vmax.f32 %v358, 0.0
    %s361 = sld [smem:[#allocation9 + $0xf]]
    %v362 = vstv %s361
    %v363 = vmul.f32 %v362, %v359
    %v364 = vmul.f32 %v362, %v360
    %v365 = vadd.f32 %v349, %v363
    %v366 = vadd.f32 %v350, %v364
    %s367 = sld [smem:[#allocation3 + $0x10]]
    %v368 = vstv %s367
    %v369 = vmul.f32 %v368, %v100
    %v370 = vmul.f32 %v368, %v107
    %s371 = sld [smem:[#allocation8 + $0x10]]
    %v372 = vstv %s371
    %v373 = vadd.f32 %v369, %v372
    %v374 = vadd.f32 %v370, %v372
    %v375 = vmax.f32 %v373, 0.0
    %v376 = vmax.f32 %v374, 0.0
    %s377 = sld [smem:[#allocation9 + $0x10]]
    %v378 = vstv %s377
    %v379 = vmul.f32 %v378, %v375
    %v380 = vmul.f32 %v378, %v376
    %v381 = vadd.f32 %v365, %v379
    %v382 = vadd.f32 %v366, %v380
    %s383 = sld [smem:[#allocation3 + $0x11]]
    %v384 = vstv %s383
    %v385 = vmul.f32 %v384, %v100
    %v386 = vmul.f32 %v384, %v107
    %s387 = sld [smem:[#allocation8 + $0x11]]
    %v388 = vstv %s387
    %v389 = vadd.f32 %v385, %v388
    %v390 = vadd.f32 %v386, %v388
    %v391 = vmax.f32 %v389, 0.0
    %v392 = vmax.f32 %v390, 0.0
    %s393 = sld [smem:[#allocation9 + $0x11]]
    %v394 = vstv %s393
    %v395 = vmul.f32 %v394, %v391
    %v396 = vmul.f32 %v394, %v392
    %v397 = vadd.f32 %v381, %v395
    %v398 = vadd.f32 %v382, %v396
    %s399 = sld [smem:[#allocation3 + $0x12]]
    %v400 = vstv %s399
    %v401 = vmul.f32 %v400, %v100
    %v402 = vmul.f32 %v400, %v107
    %s403 = sld [smem:[#allocation8 + $0x12]]
    %v404 = vstv %s403
    %v405 = vadd.f32 %v401, %v404
    %v406 = vadd.f32 %v402, %v404
    %v407 = vmax.f32 %v405, 0.0
    %v408 = vmax.f32 %v406, 0.0
    %s409 = sld [smem:[#allocation9 + $0x12]]
    %v410 = vstv %s409
    %v411 = vmul.f32 %v410, %v407
    %v412 = vmul.f32 %v410, %v408
    %v413 = vadd.f32 %v397, %v411
    %v414 = vadd.f32 %v398, %v412
    %s415 = sld [smem:[#allocation3 + $0x13]]
    %v416 = vstv %s415
    %v417 = vmul.f32 %v416, %v100
    %v418 = vmul.f32 %v416, %v107
    %s419 = sld [smem:[#allocation8 + $0x13]]
    %v420 = vstv %s419
    %v421 = vadd.f32 %v417, %v420
    %v422 = vadd.f32 %v418, %v420
    %v423 = vmax.f32 %v421, 0.0
    %v424 = vmax.f32 %v422, 0.0
    %s425 = sld [smem:[#allocation9 + $0x13]]
    %v426 = vstv %s425
    %v427 = vmul.f32 %v426, %v423
    %v428 = vmul.f32 %v426, %v424
    %v429 = vadd.f32 %v413, %v427
    %v430 = vadd.f32 %v414, %v428
    %s431 = sld [smem:[#allocation3 + $0x14]]
    %v432 = vstv %s431
    %v433 = vmul.f32 %v432, %v100
    %v434 = vmul.f32 %v432, %v107
    %s435 = sld [smem:[#allocation8 + $0x14]]
    %v436 = vstv %s435
    %v437 = vadd.f32 %v433, %v436
    %v438 = vadd.f32 %v434, %v436
    %v439 = vmax.f32 %v437, 0.0
    %v440 = vmax.f32 %v438, 0.0
    %s441 = sld [smem:[#allocation9 + $0x14]]
    %v442 = vstv %s441
    %v443 = vmul.f32 %v442, %v439
    %v444 = vmul.f32 %v442, %v440
    %v445 = vadd.f32 %v429, %v443
    %v446 = vadd.f32 %v430, %v444
    %s447 = sld [smem:[#allocation3 + $0x15]]
    %v448 = vstv %s447
    %v449 = vmul.f32 %v448, %v100
    %v450 = vmul.f32 %v448, %v107
    %s451 = sld [smem:[#allocation8 + $0x15]]
    %v452 = vstv %s451
    %v453 = vadd.f32 %v449, %v452
    %v454 = vadd.f32 %v450, %v452
    %v455 = vmax.f32 %v453, 0.0
    %v456 = vmax.f32 %v454, 0.0
    %s457 = sld [smem:[#allocation9 + $0x15]]
    %v458 = vstv %s457
    %v459 = vmul.f32 %v458, %v455
    %v460 = vmul.f32 %v458, %v456
    %v461 = vadd.f32 %v445, %v459
    %v462 = vadd.f32 %v446, %v460
    %s463 = sld [smem:[#allocation3 + $0x16]]
    %v464 = vstv %s463
    %v465 = vmul.f32 %v464, %v100
    %v466 = vmul.f32 %v464, %v107
    %s467 = sld [smem:[#allocation8 + $0x16]]
    %v468 = vstv %s467
    %v469 = vadd.f32 %v465, %v468
    %v470 = vadd.f32 %v466, %v468
    %v471 = vmax.f32 %v469, 0.0
    %v472 = vmax.f32 %v470, 0.0
    %s473 = sld [smem:[#allocation9 + $0x16]]
    %v474 = vstv %s473
    %v475 = vmul.f32 %v474, %v471
    %v476 = vmul.f32 %v474, %v472
    %v477 = vadd.f32 %v461, %v475
    %v478 = vadd.f32 %v462, %v476
    %s479 = sld [smem:[#allocation3 + $0x17]]
    %v480 = vstv %s479
    %v481 = vmul.f32 %v480, %v100
    %v482 = vmul.f32 %v480, %v107
    %s483 = sld [smem:[#allocation8 + $0x17]]
    %v484 = vstv %s483
    %v485 = vadd.f32 %v481, %v484
    %v486 = vadd.f32 %v482, %v484
    %v487 = vmax.f32 %v485, 0.0
    %v488 = vmax.f32 %v486, 0.0
    %s489 = sld [smem:[#allocation9 + $0x17]]
    %v490 = vstv %s489
    %v491 = vmul.f32 %v490, %v487
    %v492 = vmul.f32 %v490, %v488
    %v493 = vadd.f32 %v477, %v491
    %v494 = vadd.f32 %v478, %v492
    %s495 = sld [smem:[#allocation3 + $0x18]]
    %v496 = vstv %s495
    %v497 = vmul.f32 %v496, %v100
    %v498 = vmul.f32 %v496, %v107
    %s499 = sld [smem:[#allocation8 + $0x18]]
    %v500 = vstv %s499
    %v501 = vadd.f32 %v497, %v500
    %v502 = vadd.f32 %v498, %v500
    %v503 = vmax.f32 %v501, 0.0
    %v504 = vmax.f32 %v502, 0.0
    %s505 = sld [smem:[#allocation9 + $0x18]]
    %v506 = vstv %s505
    %v507 = vmul.f32 %v506, %v503
    %v508 = vmul.f32 %v506, %v504
    %v509 = vadd.f32 %v493, %v507
    %v510 = vadd.f32 %v494, %v508
    %s511 = sld [smem:[#allocation3 + $0x19]]
    %v512 = vstv %s511
    %v513 = vmul.f32 %v512, %v100
    %v514 = vmul.f32 %v512, %v107
    %s515 = sld [smem:[#allocation8 + $0x19]]
    %v516 = vstv %s515
    %v517 = vadd.f32 %v513, %v516
    %v518 = vadd.f32 %v514, %v516
    %v519 = vmax.f32 %v517, 0.0
    %v520 = vmax.f32 %v518, 0.0
    %s521 = sld [smem:[#allocation9 + $0x19]]
    %v522 = vstv %s521
    %v523 = vmul.f32 %v522, %v519
    %v524 = vmul.f32 %v522, %v520
    %v525 = vadd.f32 %v509, %v523
    %v526 = vadd.f32 %v510, %v524
    %s527 = sld [smem:[#allocation3 + $0x1a]]
    %v528 = vstv %s527
    %v529 = vmul.f32 %v528, %v100
    %v530 = vmul.f32 %v528, %v107
    %s531 = sld [smem:[#allocation8 + $0x1a]]
    %v532 = vstv %s531
    %v533 = vadd.f32 %v529, %v532
    %v534 = vadd.f32 %v530, %v532
    %v535 = vmax.f32 %v533, 0.0
    %v536 = vmax.f32 %v534, 0.0
    %s537 = sld [smem:[#allocation9 + $0x1a]]
    %v538 = vstv %s537
    %v539 = vmul.f32 %v538, %v535
    %v540 = vmul.f32 %v538, %v536
    %v541 = vadd.f32 %v525, %v539
    %v542 = vadd.f32 %v526, %v540
    %s543 = sld [smem:[#allocation3 + $0x1b]]
    %v544 = vstv %s543
    %v545 = vmul.f32 %v544, %v100
    %v546 = vmul.f32 %v544, %v107
    %s547 = sld [smem:[#allocation8 + $0x1b]]
    %v548 = vstv %s547
    %v549 = vadd.f32 %v545, %v548
    %v550 = vadd.f32 %v546, %v548
    %v551 = vmax.f32 %v549, 0.0
    %v552 = vmax.f32 %v550, 0.0
    %s553 = sld [smem:[#allocation9 + $0x1b]]
    %v554 = vstv %s553
    %v555 = vmul.f32 %v554, %v551
    %v556 = vmul.f32 %v554, %v552
    %v557 = vadd.f32 %v541, %v555
    %v558 = vadd.f32 %v542, %v556
    %s559 = sld [smem:[#allocation3 + $0x1c]]
    %v560 = vstv %s559
    %v561 = vmul.f32 %v560, %v100
    %v562 = vmul.f32 %v560, %v107
    %s563 = sld [smem:[#allocation8 + $0x1c]]
    %v564 = vstv %s563
    %v565 = vadd.f32 %v561, %v564
    %v566 = vadd.f32 %v562, %v564
    %v567 = vmax.f32 %v565, 0.0
    %v568 = vmax.f32 %v566, 0.0
    %s569 = sld [smem:[#allocation9 + $0x1c]]
    %v570 = vstv %s569
    %v571 = vmul.f32 %v570, %v567
    %v572 = vmul.f32 %v570, %v568
    %v573 = vadd.f32 %v557, %v571
    %v574 = vadd.f32 %v558, %v572
    %s575 = sld [smem:[#allocation3 + $0x1d]]
    %v576 = vstv %s575
    %v577 = vmul.f32 %v576, %v100
    %v578 = vmul.f32 %v576, %v107
    %s579 = sld [smem:[#allocation8 + $0x1d]]
    %v580 = vstv %s579
    %v581 = vadd.f32 %v577, %v580
    %v582 = vadd.f32 %v578, %v580
    %v583 = vmax.f32 %v581, 0.0
    %v584 = vmax.f32 %v582, 0.0
    %s585 = sld [smem:[#allocation9 + $0x1d]]
    %v586 = vstv %s585
    %v587 = vmul.f32 %v586, %v583
    %v588 = vmul.f32 %v586, %v584
    %v589 = vadd.f32 %v573, %v587
    %v590 = vadd.f32 %v574, %v588
    %s591 = sld [smem:[#allocation3 + $0x1e]]
    %v592 = vstv %s591
    %v593 = vmul.f32 %v592, %v100
    %v594 = vmul.f32 %v592, %v107
    %s595 = sld [smem:[#allocation8 + $0x1e]]
    %v596 = vstv %s595
    %v597 = vadd.f32 %v593, %v596
    %v598 = vadd.f32 %v594, %v596
    %v599 = vmax.f32 %v597, 0.0
    %v600 = vmax.f32 %v598, 0.0
    %s601 = sld [smem:[#allocation9 + $0x1e]]
    %v602 = vstv %s601
    %v603 = vmul.f32 %v602, %v599
    %v604 = vmul.f32 %v602, %v600
    %v605 = vadd.f32 %v589, %v603
    %v606 = vadd.f32 %v590, %v604
    %s607 = sld [smem:[#allocation3 + $0x1f]]
    %v608 = vstv %s607
    %v609 = vmul.f32 %v608, %v100
    %v610 = vmul.f32 %v608, %v107
    %s611 = sld [smem:[#allocation8 + $0x1f]]
    %v612 = vstv %s611
    %v613 = vadd.f32 %v609, %v612
    %v614 = vadd.f32 %v610, %v612
    %v615 = vmax.f32 %v613, 0.0
    %v616 = vmax.f32 %v614, 0.0
    %s617 = sld [smem:[#allocation9 + $0x1f]]
    %v618 = vstv %s617
    %v619 = vmul.f32 %v618, %v615
    %v620 = vmul.f32 %v618, %v616
    %v621 = vadd.f32 %v605, %v619
    %v622 = vadd.f32 %v606, %v620
    %v623 = vadd.f32 %v100, 1e-05
    %v624 = vadd.f32 %v107, 1e-05
    %v625 = vrcp.pop %v623
    %v626 = vrcp.pop %v624
    %v627 = vmul.f32 %v623, %v625
    %v628 = vmul.f32 %v624, %v626
    %v629 = vsub.f32 2.0, %v627
    %v630 = vsub.f32 2.0, %v628
    %v631 = vmul.f32 %v625, %v629
    %v632 = vmul.f32 %v626, %v630
    %v633 = vmul.f32 %v621, %v631
    %v634 = vmul.f32 %v622, %v632
    %v635 = vmul.f32 %v633, %v82
    %v636 = vmul.f32 %v634, %v83
    %v637 = vmul.f32 %v72, %v635
    %v638 = vmul.f32 %v73, %v636
    %v639 = vmul.f32 %v75, %v635
    %v640 = vmul.f32 %v76, %v636
    %v641 = vmul.f32 %v78, %v635
    %v642 = vmul.f32 %v79, %v636
    %643 = vadd.xlane.f32.xlu0 %v637
    %v644 = vpop.xlane.xlu0 %643
    %645 = vadd.xlane.f32.xlu0 %v638
    %v646 = vpop.xlane.xlu0 %645
    %v647 = vmul.f32 %v644, 0.0078125
    %v648 = vmul.f32 %v646, 0.0078125
    %v649 = vsub.f32 %v637, %v647
    %v650 = vsub.f32 %v638, %v648
    %651 = vst [vmem:[#allocation12] sm:$0xff] %v649
    %652 = vst [vmem:[#allocation12 + $0x8] sm:$0xff] %v650
    %653 = vadd.xlane.f32.xlu0 %v639
    %v654 = vpop.xlane.xlu0 %653
    %655 = vadd.xlane.f32.xlu0 %v640
    %v656 = vpop.xlane.xlu0 %655
    %v657 = vmul.f32 %v654, 0.0078125
    %v658 = vmul.f32 %v656, 0.0078125
    %v659 = vsub.f32 %v639, %v657
    %v660 = vsub.f32 %v640, %v658
    %s661 = scalar_lea.vmem [#allocation12], 16
    %662 = vst [vmem:[%s661] sm:$0xff] %v659
    %663 = vst [vmem:[%s661 + $0x8] sm:$0xff] %v660
    %664 = vadd.xlane.f32.xlu0 %v641
    %v665 = vpop.xlane.xlu0 %664
    %666 = vadd.xlane.f32.xlu0 %v642
    %v667 = vpop.xlane.xlu0 %666
    %v668 = vmul.f32 %v665, 0.0078125
    %v669 = vmul.f32 %v667, 0.0078125
    %v670 = vsub.f32 %v641, %v668
    %v671 = vsub.f32 %v642, %v669
    %s672 = scalar_lea.vmem [#allocation12], 32
    %673 = vst [vmem:[%s672] sm:$0xff] %v670
    %674 = vst [vmem:[%s672 + $0x8] sm:$0xff] %v671
    // Predicated region
    $region42: #{tpu_custom_call.1} parent=1 // pred_check
      _
    $region43: #{tpu_custom_call.1} parent=1 // pred_check_branch
      %676 = sbr.rel (0) target = $region45
    $region44: #{tpu_custom_call.1} parent=1 // pred_region
      %s678 = ssub.s32 768, 768
      %679 = vsyncadd [#allocation5], %s678
      %s680 = sshll.u32 [#allocation12], 4
      %s681 = int_to_ptr.vmem [resolvable:$true] %s680
      %686 = dma.vmem_to_hbm [thread:$0]  %s681, 768, %s6, [#allocation5], 128, 128, 8
    $region45: #{tpu_custom_call.1} parent=1 // pred_fallthru
      _
    // Predicated region
    $region46: #{tpu_custom_call.1} parent=1 // pred_check
      _
    $region47: #{tpu_custom_call.1} parent=1 // pred_check_branch
      %688 = sbr.rel (0) target = $region49
    $region48: #{tpu_custom_call.1} parent=1 // pred_region
      %689 = dma.done [#allocation5], 768
    $region49: #{tpu_custom_call.1} parent=1 // pred_fallthru
      _
    %690 = vsyncpa [#allocation4], 1
    %691 = vsyncpa [#allocation5], 1
    %692 = vsyncpa [#allocation6], 1
    %693 = vsyncpa [#allocation10], 1
    %694 = vsyncpa [#allocation7], 1

</llo_original>
